<compile_context>
chip_gen: v5e
topology: v5e:2x2
jax: 0.10.0
libtpu: 0.0.40
codegen_flags: <defaults>
</compile_context>

<pallas_src>
import functools

import jax
import jax.numpy as jnp
from jax.experimental import pallas as pl
from jax.experimental.pallas import tpu as pltpu

EPS = 1e-5


# ---------------------------------------------------------------------------
# Kernels
# ---------------------------------------------------------------------------
def _ln_kernel_bias(x_ref, w_ref, b_ref, o_ref, *, inv_d, lowp_store):
    # x_ref: (tile_rows, D) block in VMEM; w_ref/b_ref: (1, D), resident.
    x = x_ref[...].astype(jnp.float32)
    mean = jnp.sum(x, axis=-1, keepdims=True) * inv_d
    xc = x - mean
    var = jnp.sum(xc * xc, axis=-1, keepdims=True) * inv_d   # biased variance
    inv = jax.lax.rsqrt(var + EPS)
    if lowp_store:
        # Reductions stay f32; final scale/shift in the (bf16) output dtype.
        y = (xc * inv).astype(o_ref.dtype) * w_ref[...].astype(o_ref.dtype) \
            + b_ref[...].astype(o_ref.dtype)
    else:
        y = xc * inv * w_ref[...].astype(jnp.float32) \
            + b_ref[...].astype(jnp.float32)
    o_ref[...] = y.astype(o_ref.dtype)


def _ln_kernel_nobias(x_ref, w_ref, o_ref, *, inv_d, lowp_store):
    x = x_ref[...].astype(jnp.float32)
    mean = jnp.sum(x, axis=-1, keepdims=True) * inv_d
    xc = x - mean
    var = jnp.sum(xc * xc, axis=-1, keepdims=True) * inv_d
    inv = jax.lax.rsqrt(var + EPS)
    if lowp_store:
        y = (xc * inv).astype(o_ref.dtype) * w_ref[...].astype(o_ref.dtype)
    else:
        y = xc * inv * w_ref[...].astype(jnp.float32)
    o_ref[...] = y.astype(o_ref.dtype)


# ---------------------------------------------------------------------------
# Tile sizing
# ---------------------------------------------------------------------------
def _device_kind():
    try:
        return jax.devices()[0].device_kind.lower()
    except Exception:
        return ""


def _vmem_budgets(kind):
    """(block budget for tile sizing, vmem_limit_bytes) per generation."""
    if "v7" in kind:
        # v7x: 64 MiB physical VMEM per TC -> keep headroom.
        return 20 * 1024 * 1024, 40 * 1024 * 1024
    # v5e / v6e (and v5p): 128 MiB VMEM -> bigger tiles amortize per-step overhead.
    return 40 * 1024 * 1024, 64 * 1024 * 1024


def _sublane_rows(dtype):
    """Minimum row multiple so sub-32-bit dtypes fully pack sublanes."""
    itemsize = jnp.dtype(dtype).itemsize
    return max(8, 32 // max(1, itemsize))   # 8 for f32, 16 for bf16, 32 for i8/fp8


def _pick_tile_rows(num_rows, d, in_dtype, out_dtype, block_budget_bytes):
    """Largest sublane-aligned row tile whose working set fits the budget,
    while keeping at least 2 grid steps for megacore sharding."""
    sub = _sublane_rows(in_dtype)
    in_b = jnp.dtype(in_dtype).itemsize
    out_b = jnp.dtype(out_dtype).itemsize
    # Double-buffered x block + double-buffered out block + ~3 full-tile f32
    # temporaries live in-kernel (x32, xc, y).
    per_row = 2 * d * in_b + 2 * d * out_b + 3 * d * 4
    max_by_vmem = max(1, block_budget_bytes // max(1, per_row))

    rows_rounded = ((num_rows + sub - 1) // sub) * sub
    tile = min(max_by_vmem, rows_rounded)
    tile = max(sub, (tile // sub) * sub)    # align to sublane packing

    # Guarantee >= 2 grid steps when possible so ("parallel",) can shard rows
    # across both v7x TensorCores (each TC contributes HBM bandwidth).
    if tile >= rows_rounded and rows_rounded >= 2 * sub:
        half = (rows_rounded + 1) // 2
        tile = max(sub, ((half + sub - 1) // sub) * sub)

    # TODO(synk): for very large D the sublane-minimum tile can still exceed
    # the budget; a two-pass D-chunked variant would be needed in that regime.
    return tile


# ---------------------------------------------------------------------------
# Wrapper
# ---------------------------------------------------------------------------
def layer_norm_pallas(x, weight, bias=None, *, tile_rows=None):
    """x: (..., D). weight: (D,). bias: (D,) or None.  Matches F.layer_norm."""
    orig_shape = x.shape
    D = orig_shape[-1]
    x2 = x.reshape(-1, D)
    R = x2.shape[0]

    kind = _device_kind()
    block_budget, vmem_limit = _vmem_budgets(kind)
    if tile_rows is None:
        tile_rows = _pick_tile_rows(R, D, x.dtype, x.dtype, block_budget)

    # Ragged tail: NO padding / slicing.  Rows are independent; the last
    # partial block's out-of-bounds rows read padded junk and their writes are
    # dropped by Pallas, so no extra HBM round-trips are spent.
    num_blocks = pl.cdiv(R, tile_rows)

    inv_d = 1.0 / float(D)
    # bf16 store-path tweak only where the VPU has bf16 (v6e / v7x).
    lowp_store = (jnp.dtype(x.dtype) == jnp.bfloat16) and ("v5" not in kind)

    row_spec = pl.BlockSpec((tile_rows, D), lambda i: (i, 0))
    vec_spec = pl.BlockSpec((1, D), lambda i: (0, 0))

    itemsize = jnp.dtype(x.dtype).itemsize
    bytes_accessed = 2 * R * D * itemsize + D * jnp.dtype(weight.dtype).itemsize
    if bias is not None:
        bytes_accessed += D * jnp.dtype(bias.dtype).itemsize
    cost = pl.CostEstimate(flops=8 * R * D, transcendentals=R,
                           bytes_accessed=bytes_accessed)

    if bias is not None:
        kernel = functools.partial(_ln_kernel_bias, inv_d=inv_d,
                                   lowp_store=lowp_store)
        in_specs = [row_spec, vec_spec, vec_spec]
        args = (x2, weight.reshape(1, D), bias.reshape(1, D))
    else:
        kernel = functools.partial(_ln_kernel_nobias, inv_d=inv_d,
                                   lowp_store=lowp_store)
        in_specs = [row_spec, vec_spec]
        args = (x2, weight.reshape(1, D))

    out = pl.pallas_call(
        kernel,
        out_shape=jax.ShapeDtypeStruct((R, D), x.dtype),
        grid_spec=pltpu.PrefetchScalarGridSpec(
            num_scalar_prefetch=0,
            grid=(num_blocks,),
            in_specs=in_specs,
            out_specs=row_spec,
        ),
        compiler_params=pltpu.CompilerParams(
            dimension_semantics=("parallel",),   # shards rows across TCs on v7x
            vmem_limit_bytes=vmem_limit,
        ),
        cost_estimate=cost,
    )(*args)

    return out.reshape(orig_shape)


# ---------------------------------------------------------------------------
# Reference + test
# ---------------------------------------------------------------------------
def _reference_layer_norm(x, weight, bias):
    x32 = x.astype(jnp.float32)
    mean = jnp.mean(x32, axis=-1, keepdims=True)
    var = jnp.mean((x32 - mean) ** 2, axis=-1, keepdims=True)
    y = (x32 - mean) / jnp.sqrt(var + EPS)
    y = y * weight.astype(jnp.float32)
    if bias is not None:
        y = y + bias.astype(jnp.float32)
    return y.astype(x.dtype)


if __name__ == "__main__":
    key = jax.random.PRNGKey(0)

    # Small shape consistent with the GPT-2 module: (B, T, D) = (2, 8, 32).
    B, T, D = 2, 8, 32
    x = jax.random.normal(key, (B, T, D), dtype=jnp.float32)

    # Parameters as in nn.Parameter(torch.ones(ndim)/torch.zeros(ndim)).
    weight = jnp.ones((D,), dtype=jnp.float32)
    bias = jnp.zeros((D,), dtype=jnp.float32)

    # bias=True path
    out = layer_norm_pallas(x, weight, bias)
    jax.block_until_ready(out)
    ref = _reference_layer_norm(x, weight, bias)
    assert jnp.allclose(out, ref, atol=1e-5, rtol=1e-5)

    # bias=False path (no zeros array streamed from HBM)
    out_nb = layer_norm_pallas(x, weight, None)
    jax.block_until_ready(out_nb)
    ref_nb = _reference_layer_norm(x, weight, None)
    assert jnp.allclose(out_nb, ref_nb, atol=1e-5, rtol=1e-5)

    # Ragged row count (R = 15 not a multiple of the tile) to exercise the
    # non-divisible grid path (no pad / slice in the wrapper).
    key2 = jax.random.PRNGKey(1)
    x_rag = jax.random.normal(key2, (3, 5, D), dtype=jnp.float32)
    out_rag = layer_norm_pallas(x_rag, weight, bias)
    jax.block_until_ready(out_rag)
    ref_rag = _reference_layer_norm(x_rag, weight, bias)
    assert jnp.allclose(out_rag, ref_rag, atol=1e-5, rtol=1e-5)

    print("KERNEL_OK")
</pallas_src>

<mosaic_0001>
module attributes {stable_mosaic.version = 11 : i64} {
  func.func @_ln_kernel_bias(%arg0: i32, %arg1: memref<8x32xf32, #tpu.memory_space<vmem>>, %arg2: memref<1x32xf32, #tpu.memory_space<vmem>>, %arg3: memref<1x32xf32, #tpu.memory_space<vmem>>, %arg4: memref<8x32xf32, #tpu.memory_space<vmem>>) attributes {dimension_semantics = [#tpu.dimension_semantics<parallel>], iteration_bounds = array<i64: 2>, scalar_prefetch = 0 : i64, scratch_operands = 0 : i64, tpu.core_type = #tpu.core_type<tc>, window_params = [{transform_indices = @transform_0, window_bounds = array<i64: 8, 32>}, {pipeline_mode = #tpu.pipeline_mode<synchronous>, transform_indices = @transform_1, window_bounds = array<i64: 1, 32>}, {pipeline_mode = #tpu.pipeline_mode<synchronous>, transform_indices = @transform_2, window_bounds = array<i64: 1, 32>}, {transform_indices = @transform_3, window_bounds = array<i64: 8, 32>}]} {
    %c0 = arith.constant 0 : index
    %c0_0 = arith.constant 0 : index
    %0 = vector.load %arg1[%c0, %c0_0] : memref<8x32xf32, #tpu.memory_space<vmem>>, vector<8x32xf32>
    %cst = arith.constant dense<0.000000e+00> : vector<8xf32>
    %1 = vector.multi_reduction <add>, %0, %cst [1] : vector<8x32xf32> to vector<8xf32>
    %2 = vector.shape_cast %1 : vector<8xf32> to vector<8x1xf32>
    %cst_1 = arith.constant 3.125000e-02 : f32
    %3 = vector.broadcast %cst_1 : f32 to vector<8x1xf32>
    %4 = arith.mulf %2, %3 : vector<8x1xf32>
    %5 = vector.broadcast %4 : vector<8x1xf32> to vector<8x32xf32>
    %6 = arith.subf %0, %5 : vector<8x32xf32>
    %7 = arith.mulf %6, %6 : vector<8x32xf32>
    %cst_2 = arith.constant dense<0.000000e+00> : vector<8xf32>
    %8 = vector.multi_reduction <add>, %7, %cst_2 [1] : vector<8x32xf32> to vector<8xf32>
    %9 = vector.shape_cast %8 : vector<8xf32> to vector<8x1xf32>
    %cst_3 = arith.constant 3.125000e-02 : f32
    %10 = vector.broadcast %cst_3 : f32 to vector<8x1xf32>
    %11 = arith.mulf %9, %10 : vector<8x1xf32>
    %cst_4 = arith.constant 9.99999974E-6 : f32
    %12 = vector.broadcast %cst_4 : f32 to vector<8x1xf32>
    %13 = arith.addf %11, %12 : vector<8x1xf32>
    %14 = math.rsqrt %13 : vector<8x1xf32>
    %15 = vector.broadcast %14 : vector<8x1xf32> to vector<8x32xf32>
    %16 = arith.mulf %6, %15 : vector<8x32xf32>
    %c0_5 = arith.constant 0 : index
    %c0_6 = arith.constant 0 : index
    %17 = vector.load %arg2[%c0_5, %c0_6] : memref<1x32xf32, #tpu.memory_space<vmem>>, vector<1x32xf32>
    %18 = vector.broadcast %17 : vector<1x32xf32> to vector<8x32xf32>
    %19 = arith.mulf %16, %18 : vector<8x32xf32>
    %c0_7 = arith.constant 0 : index
    %c0_8 = arith.constant 0 : index
    %20 = vector.load %arg3[%c0_7, %c0_8] : memref<1x32xf32, #tpu.memory_space<vmem>>, vector<1x32xf32>
    %21 = vector.broadcast %20 : vector<1x32xf32> to vector<8x32xf32>
    %22 = arith.addf %19, %21 : vector<8x32xf32>
    %c0_9 = arith.constant 0 : index
    %c0_10 = arith.constant 0 : index
    %23 = vector.load %arg4[%c0_9, %c0_10] : memref<8x32xf32, #tpu.memory_space<vmem>>, vector<8x32xf32>
    tpu.vector_store %arg4[%c0_9, %c0_10], %22 {strides = array<i32>} : memref<8x32xf32, #tpu.memory_space<vmem>>, vector<8x32xf32>,
    return
  }
  func.func @transform_0(%arg0: i32) -> (i32, i32) {
    %c0_i32 = arith.constant 0 : i32
    %c0_i32_0 = arith.constant 0 : i32
    return %arg0, %c0_i32 : i32, i32
  }
  func.func @transform_1(%arg0: i32) -> (i32, i32) {
    %c0_i32 = arith.constant 0 : i32
    %c0_i32_0 = arith.constant 0 : i32
    %c0_i32_1 = arith.constant 0 : i32
    return %c0_i32, %c0_i32_0 : i32, i32
  }
  func.func @transform_2(%arg0: i32) -> (i32, i32) {
    %c0_i32 = arith.constant 0 : i32
    %c0_i32_0 = arith.constant 0 : i32
    %c0_i32_1 = arith.constant 0 : i32
    return %c0_i32, %c0_i32_0 : i32, i32
  }
  func.func @transform_3(%arg0: i32) -> (i32, i32) {
    %c0_i32 = arith.constant 0 : i32
    %c0_i32_0 = arith.constant 0 : i32
    return %arg0, %c0_i32 : i32, i32
  }
}

</mosaic_0001>

<llo_original>
// kernel: tpu_custom_call.1
$region0: #{tpu_custom_call.1}
  #allocation0 [shape = 'u32[]', space=smem, size = 0x4, offset = 0x4, fixed_abs, tag = 'smem constant byte address 0x4 - core index']
  #allocation1 [shape = 'u32[72,128]{1,0:T(1,128)}', space=vmem, size = 0x9000, scoped, tag = 'internal scratch']
  %s0 = inlined_call_operand.hbm [shape: f32[16,32], index: 0, kind: input, shape index: {}]
  %s1 = inlined_call_operand.hbm [shape: f32[1,32], index: 1, kind: input, shape index: {}]
  %s2 = inlined_call_operand.vmem [shape: f32[1,32], index: 2, kind: input, shape index: {}]
  %s3 = inlined_call_operand.hbm [shape: f32[16,32], index: 3, kind: output, shape index: {}]
  %s4 = sld [smem:[#allocation0]]
  $region53: #{tpu_custom_call.1} parent=0
    _
  %s6 = ssub.s32 1, %s4
  %s7 = scalar_select 0, %s6, %s4
  $region1: #{tpu_custom_call.1} parent=0
    #allocation2 [shape = 'u8[8192]{0}', space=vmem, size = 0x2000, scoped, tag = 'input window, operand 0']
    #allocation3 [shape = 's32[2]{0}', space=sflag, size = 0x8, scoped, tag = 'scoped memory for tpu_custom_call.1']
    #allocation4 [shape = 's32[2]{0}', space=sflag, size = 0x8, scoped, tag = 'scoped memory for tpu_custom_call.1']
    #allocation5 [shape = 'u8[512]{0}', space=vmem, size = 0x400, scoped, tag = 'input window, operand 1, single buffered']
    #allocation6 [shape = 's32[1]{0}', space=sflag, size = 0x4, scoped, tag = 'scoped memory for tpu_custom_call.1']
    #allocation7 [shape = 'u8[8192]{0}', space=vmem, size = 0x2000, scoped, tag = 'output window, operand 0']
    %8 = vsyncpa [#allocation3], 0
    %s9 = scalar_lea.sflag [#allocation3], 1
    %10 = vsyncpa %s9, 0
    %11 = vsyncpa [#allocation6], 0
    %12 = vsyncpa [#allocation4], 0
    %s13 = scalar_lea.sflag [#allocation4], 1
    %14 = vsyncpa %s13, 0
    loop: start=0, step=1, limit=4
    $region2: #{tpu_custom_call.1} parent=1 // loop_pre_header
      _
    $region3: #{tpu_custom_call.1} parent=1 // loop_header
      %s16 = sphi 0, %s20
      %p17 = scmp.ge.s32.totalorder %s16, 4
      %s26 = sphi 0, %s28
      %s29 = sphi 0, %s26
      %s30 = sphi 0, %s29
      %s46 = sphi 0, %s30
      %s50 = sphi 0, %s50
      %s52 = sphi 0, %s50
      %s53 = sphi 0, %s52
      %s67 = sphi 0, %s53
      %s71 = sphi 0, %s71
      %s73 = sphi 0, %s71
      %s74 = sphi 0, %s73
      %s88 = sphi 0, %s74
      %s94 = sphi 0, %s96
      %s97 = sphi 0, %s94
      %s98 = sphi 0, %s97
      %s114 = sphi 0, %s98
    $region4: #{tpu_custom_call.1} parent=1 // loop_header_branch
      %19 = sbr.rel (%p17) target = $region8
    $region5: #{tpu_custom_call.1} parent=1 // loop_body
      %s21 = ssub.s32 %s16, 1
      %s22 = ssub.s32 %s16, 2
      %s23 = sadd.s32 %s16, 1
      %s24 = ssub.s32 %s16, %s23
      %p25 = scmp.eq.s32.totalorder %s24, 0
      %s27 = sadd.s32 %s26, 1
      %s28 = scalar_select %p25, %s26, %s27
      %p31 = pneg %p25
      %p32 = scmp.eq.s32.totalorder %s16, 1
      %p33 = por %p31, %p32
      %p34 = scmp.ne.s32.totalorder %s26, %s29
      %p35 = scmp.eq.s32.totalorder %s16, 0
      %p36 = por %p34, %p35
      %p37 = scmp.ne.s32.totalorder %s26, %s29
      %p38 = scmp.eq.s32.totalorder %s21, 1
      %p39 = por %p37, %p38
      %p40 = scmp.ne.s32.totalorder %s29, %s30
      %p41 = scmp.eq.s32.totalorder %s21, 0
      %p42 = por %p40, %p41
      %p43 = scmp.ne.s32.totalorder %s29, %s30
      %p44 = scmp.eq.s32.totalorder %s22, 1
      %p45 = por %p43, %p44
      %p47 = scmp.ne.s32.totalorder %s30, %s46
      %p48 = scmp.eq.s32.totalorder %s22, 0
      %p49 = por %p47, %p48
      %s51 = sadd.s32 %s50, 1
      %p54 = scmp.eq.s32.totalorder %s16, 1
      %p55 = scmp.ne.s32.totalorder %s50, %s52
      %p56 = scmp.eq.s32.totalorder %s16, 0
      %p57 = por %p55, %p56
      %p58 = scmp.ne.s32.totalorder %s50, %s52
      %p59 = scmp.eq.s32.totalorder %s21, 1
      %p60 = por %p58, %p59
      %p61 = scmp.ne.s32.totalorder %s52, %s53
      %p62 = scmp.eq.s32.totalorder %s21, 0
      %p63 = por %p61, %p62
      %p64 = scmp.ne.s32.totalorder %s52, %s53
      %p65 = scmp.eq.s32.totalorder %s22, 1
      %p66 = por %p64, %p65
      %p68 = scmp.ne.s32.totalorder %s53, %s67
      %p69 = scmp.eq.s32.totalorder %s22, 0
      %p70 = por %p68, %p69
      %s72 = sadd.s32 %s71, 1
      %p75 = scmp.eq.s32.totalorder %s16, 1
      %p76 = scmp.ne.s32.totalorder %s71, %s73
      %p77 = scmp.eq.s32.totalorder %s16, 0
      %p78 = por %p76, %p77
      %p79 = scmp.ne.s32.totalorder %s71, %s73
      %p80 = scmp.eq.s32.totalorder %s21, 1
      %p81 = por %p79, %p80
      %p82 = scmp.ne.s32.totalorder %s73, %s74
      %p83 = scmp.eq.s32.totalorder %s21, 0
      %p84 = por %p82, %p83
      %p85 = scmp.ne.s32.totalorder %s73, %s74
      %p86 = scmp.eq.s32.totalorder %s22, 1
      %p87 = por %p85, %p86
      %p89 = scmp.ne.s32.totalorder %s74, %s88
      %p90 = scmp.eq.s32.totalorder %s22, 0
      %p91 = por %p89, %p90
      %s92 = ssub.s32 %s16, %s23
      %p93 = scmp.eq.s32.totalorder %s92, 0
      %s95 = sadd.s32 %s94, 1
      %s96 = scalar_select %p93, %s94, %s95
      %p99 = pneg %p93
      %p100 = scmp.eq.s32.totalorder %s16, 1
      %p101 = por %p99, %p100
      %p102 = scmp.ne.s32.totalorder %s94, %s97
      %p103 = scmp.eq.s32.totalorder %s16, 0
      %p104 = por %p102, %p103
      %p105 = scmp.ne.s32.totalorder %s94, %s97
      %p106 = scmp.eq.s32.totalorder %s21, 1
      %p107 = por %p105, %p106
      %p108 = scmp.ne.s32.totalorder %s97, %s98
      %p109 = scmp.eq.s32.totalorder %s21, 0
      %p110 = por %p108, %p109
      %p111 = scmp.ne.s32.totalorder %s97, %s98
      %p112 = scmp.eq.s32.totalorder %s22, 1
      %p113 = por %p111, %p112
      %p115 = scmp.ne.s32.totalorder %s98, %s114
      %p116 = scmp.eq.s32.totalorder %s22, 0
      %p117 = por %p115, %p116
      %p118 = scmp.le.s32.totalorder 1, %s16
      %p119 = scmp.lt.s32.totalorder %s16, 3
      %p120 = pnand %p118, %p119
      %p121 = pneg %p120
      // Predicated region
      $region9: #{tpu_custom_call.1} parent=5 // pred_check
        _
      $region10: #{tpu_custom_call.1} parent=5 // pred_check_branch
        %123 = sbr.rel (%p120) target = $region12
      $region11: #{tpu_custom_call.1} parent=5 // pred_region
        %s124 = ssub.s32 %s16, 1
        // Predicated region
        $region13: #{tpu_custom_call.1} parent=11 // pred_check
          %p125 = pneg %p63
        $region14: #{tpu_custom_call.1} parent=11 // pred_check_branch
          %127 = sbr.rel (%p125) target = $region16
        $region15: #{tpu_custom_call.1} parent=11 // pred_region
          %129 = vsyncadd [#allocation6], 0
          %s131 = sshll.u32 %s1, 4
          %s132 = int_to_ptr.hbm [resolvable:$true] %s131
          %s133 = sshll.u32 [#allocation5], 4
          %s134 = int_to_ptr.vmem [resolvable:$true] %s133
          %136 = dma.hbm_to_vmem [thread:$0]  %s132, 16, %s134, [#allocation6]
        $region16: #{tpu_custom_call.1} parent=11 // pred_fallthru
          _
        // Predicated region
        $region17: #{tpu_custom_call.1} parent=11 // pred_check
          %p137 = pneg %p84
        $region18: #{tpu_custom_call.1} parent=11 // pred_check_branch
          %139 = sbr.rel (%p137) target = $region20
        $region19: #{tpu_custom_call.1} parent=11 // pred_region
          _
        $region20: #{tpu_custom_call.1} parent=11 // pred_fallthru
          _
      $region12: #{tpu_custom_call.1} parent=5 // pred_fallthru
        _
      %p140 = scmp.lt.s32.totalorder %s16, 2
      // Predicated region
      $region21: #{tpu_custom_call.1} parent=5 // pred_check
        %p141 = pneg %p140
      $region22: #{tpu_custom_call.1} parent=5 // pred_check_branch
        %143 = sbr.rel (%p141) target = $region24
      $region23: #{tpu_custom_call.1} parent=5 // pred_region
        // Predicated region
        $region25: #{tpu_custom_call.1} parent=23 // pred_check
          %p144 = pneg %p36
        $region26: #{tpu_custom_call.1} parent=23 // pred_check_branch
          %146 = sbr.rel (%p144) target = $region28
        $region27: #{tpu_custom_call.1} parent=23 // pred_region
          %s147 = sand.u32 %s26, 1
          %s148 = scalar_lea.sflag [#allocation3], %s147
          %s149 = sand.u32 %s26, 1
          %s150 = smul.addr %s149, 8
          %s151 = scalar_lea.vmem [#allocation2], %s150
          %153 = vsyncadd %s148, 0
          %s154 = smul.addr %s16, 8
          %s155 = scalar_lea.hbm %s0, %s154
          %s157 = sshll.u32 %s155, 4
          %s158 = int_to_ptr.hbm [resolvable:$true] %s157
          %s159 = sshll.u32 %s151, 4
          %s160 = int_to_ptr.vmem [resolvable:$true] %s159
          %162 = dma.hbm_to_vmem [thread:$0]  %s158, 128, %s160, %s148
        $region28: #{tpu_custom_call.1} parent=23 // pred_fallthru
          _
      $region24: #{tpu_custom_call.1} parent=5 // pred_fallthru
        _
      %p163 = scmp.le.s32.totalorder 1, %s16
      %p164 = scmp.lt.s32.totalorder %s16, 3
      %p165 = pnand %p163, %p164
      %p166 = pneg %p165
      // Predicated region
      $region29: #{tpu_custom_call.1} parent=5 // pred_check
        _
      $region30: #{tpu_custom_call.1} parent=5 // pred_check_branch
        %168 = sbr.rel (%p165) target = $region32
      $region31: #{tpu_custom_call.1} parent=5 // pred_region
        %s169 = ssub.s32 %s16, 1
        %s170 = sand.u32 %s29, 1
        %s171 = scalar_lea.sflag [#allocation3], %s170
        %s172 = sand.u32 %s29, 1
        %s173 = smul.addr %s172, 8
        %s174 = scalar_lea.vmem [#allocation2], %s173
        // Predicated region
        $region33: #{tpu_custom_call.1} parent=31 // pred_check
          %p175 = pneg %p42
        $region34: #{tpu_custom_call.1} parent=31 // pred_check_branch
          %177 = sbr.rel (%p175) target = $region36
        $region35: #{tpu_custom_call.1} parent=31 // pred_region
          %179 = dma.done %s171, 128
        $region36: #{tpu_custom_call.1} parent=31 // pred_fallthru
          _
        // Predicated region
        $region37: #{tpu_custom_call.1} parent=31 // pred_check
          %p180 = pneg %p63
        $region38: #{tpu_custom_call.1} parent=31 // pred_check_branch
          %182 = sbr.rel (%p180) target = $region40
        $region39: #{tpu_custom_call.1} parent=31 // pred_region
          %184 = dma.done [#allocation6], 16
        $region40: #{tpu_custom_call.1} parent=31 // pred_fallthru
          _
        %s185 = sand.u32 %s29, 1
        %s186 = scalar_lea.sflag [#allocation3], %s185
        %s187 = sand.u32 %s29, 1
        %s188 = smul.addr %s187, 8
        %s189 = scalar_lea.vmem [#allocation2], %s188
        %p190 = pneg %p42
        %p191 = pneg %p39
        %p192 = pneg %p63
        %p193 = pneg %p60
        %p194 = pneg %p84
        %p195 = pneg %p81
        %p196 = pneg %p110
        %p197 = pneg %p107
        %s198 = sand.u32 %s97, 1
        %s199 = scalar_lea.sflag [#allocation4], %s198
        %s200 = sand.u32 %s97, 1
        %s201 = smul.addr %s200, 8
        %s202 = scalar_lea.vmem [#allocation7], %s201
        %v203 = vld [vmem:[%s174] sm:$0xff]
        %vm204 = vcmask 261120
        %v205 = vsel %vm204, %v203, 0.0
        %206 = vadd.xlane.f32.xlu0 %v205
        %v207 = vpop.xlane.xlu0 %206
        %v208 = vmul.f32 %v207, 0.03125
        %v209 = vsub.f32 %v203, %v208
        %v210 = vmul.f32 %v209, %v209
        %v211 = vsel %vm204, %v210, 0.0
        %212 = vadd.xlane.f32.xlu0 %v211
        %v213 = vpop.xlane.xlu0 %212
        %v214 = vmul.f32 %v213, 0.03125
        %v215 = vadd.f32 %v214, 1e-05
        %v216 = vrsqrt.pop %v215
        %v217 = vmul.f32 %v216, %v215
        %v218 = vmul.f32 %v217, %v216
        %v219 = vmul.f32 0.5, %v218
        %v220 = vsub.f32 1.5, %v219
        %v221 = vmul.f32 %v216, %v220
        %vm222 = vweird.f32 %v215
        %vm223 = vweird.f32 %v216
        %vm224 = vmor %vm222, %vm223
        %v225 = vsel %vm224, %v216, %v221
        %v226 = vmul.f32 %v209, %v225
        %v227 = vld [vmem:[#allocation5] sm:$0x1]
        %v229 = vperm.slane %v227, 0
        %v231 = vmul.f32 %v226, %v229
        %v232 = vld [vmem:[%s2] sm:$0x1]
        %v234 = vperm.slane %v232, 0
        %v236 = vadd.f32 %v231, %v234
        %237 = vst.msk [vmem:[%s202] sm:$0xff] %vm204, %v236
        %s238 = sand.u32 %s97, 1
        %s239 = scalar_lea.sflag [#allocation4], %s238
        %s240 = sand.u32 %s97, 1
        %s241 = smul.addr %s240, 8
        %s242 = scalar_lea.vmem [#allocation7], %s241
        // Predicated region
        $region41: #{tpu_custom_call.1} parent=31 // pred_check
          %p243 = pneg %p107
        $region42: #{tpu_custom_call.1} parent=31 // pred_check_branch
          %245 = sbr.rel (%p243) target = $region44
        $region43: #{tpu_custom_call.1} parent=31 // pred_region
          %247 = vsyncadd %s239, 0
          %s248 = smul.addr %s21, 8
          %s249 = scalar_lea.hbm %s3, %s248
          %s251 = sshll.u32 %s242, 4
          %s252 = int_to_ptr.vmem [resolvable:$true] %s251
          %s253 = sshll.u32 %s249, 4
          %s254 = int_to_ptr.hbm [resolvable:$true] %s253
          %256 = dma.vmem_to_hbm [thread:$0]  %s252, 128, %s254, %s239
        $region44: #{tpu_custom_call.1} parent=31 // pred_fallthru
          _
      $region32: #{tpu_custom_call.1} parent=5 // pred_fallthru
        _
      %p257 = scmp.le.s32.totalorder 2, %s16
      // Predicated region
      $region45: #{tpu_custom_call.1} parent=5 // pred_check
        %p258 = pneg %p257
      $region46: #{tpu_custom_call.1} parent=5 // pred_check_branch
        %260 = sbr.rel (%p258) target = $region48
      $region47: #{tpu_custom_call.1} parent=5 // pred_region
        %s261 = ssub.s32 %s16, 2
        // Predicated region
        $region49: #{tpu_custom_call.1} parent=47 // pred_check
          %p262 = pneg %p113
        $region50: #{tpu_custom_call.1} parent=47 // pred_check_branch
          %264 = sbr.rel (%p262) target = $region52
        $region51: #{tpu_custom_call.1} parent=47 // pred_region
          %s265 = sand.u32 %s98, 1
          %s266 = scalar_lea.sflag [#allocation4], %s265
          %s267 = sand.u32 %s98, 1
          %s268 = smul.addr %s267, 8
          %s269 = scalar_lea.vmem [#allocation7], %s268
          %271 = dma.done %s266, 128
        $region52: #{tpu_custom_call.1} parent=47 // pred_fallthru
          _
      $region48: #{tpu_custom_call.1} parent=5 // pred_fallthru
        _
    $region6: #{tpu_custom_call.1} parent=1 // loop_footer
      %s20 = sadd.s32 1, %s16
    $region7: #{tpu_custom_call.1} parent=1 // loop_footer_branch
      %15 = sbr.rel target = $region3
    $region8: #{tpu_custom_call.1} parent=1 // loop_exit
      _
    %272 = vsyncpa [#allocation3], 1
    %s273 = scalar_lea.sflag [#allocation3], 1
    %274 = vsyncpa %s273, 1
    %275 = vsyncpa [#allocation6], 1
    %276 = vsyncpa [#allocation4], 1
    %s277 = scalar_lea.sflag [#allocation4], 1
    %278 = vsyncpa %s277, 1

</llo_original>
